<compile_context>
chip_gen: v5e
topology: v5e:2x2
jax: 0.10.0
libtpu: 0.0.40
codegen_flags: <defaults>
</compile_context>

<pallas_src>
import jax
import jax.numpy as jnp
from jax.experimental import pallas as pl
from jax.experimental.pallas import tpu as pltpu


def _round_up(x, m):
    return ((x + m - 1) // m) * m


def _choose_tm(B, tm_req):
    """Batch-tile size: multiple of 128 lanes, as large as VMEM comfortably
    allows (grid-step overhead is the binding cost for this kernel)."""
    tm = max(128, min(_round_up(tm_req, 128), 16384))
    tm = min(tm, _round_up(B, 128))
    # Keep >= 2 grid steps only when the batch is big enough that splitting
    # doesn't make steps overhead-dominated (v7x megacore; harmless elsewhere).
    if B >= 4096 and pl.cdiv(B, tm) < 2:
        tm = max(128, _round_up(pl.cdiv(B, 2), 128))
    return tm


def tabnet_kernel(xt_ref, w1_ref, b1c_ref, w2_ref, b2c_ref, w3c_ref, b3_ref, o_ref):
    """One batch tile, transposed (batch-on-lanes) layout: (13, tm) -> (1, tm)."""
    mxu_dtype = w1_ref.dtype            # bf16 or f32 MXU feed; accumulation is f32

    xt = xt_ref[...].astype(mxu_dtype)                              # (13, tm)

    # fc1: (64, 13) @ (13, tm) -> (64, tm), f32 accumulation on the MXU.
    h1 = jnp.dot(w1_ref[...], xt, preferred_element_type=jnp.float32)
    h1 = jnp.maximum(h1 + b1c_ref[...], 0.0)                        # (64, tm) f32

    # fc2: (32, 64) @ (64, tm) -> (32, tm), canonical contraction, no transpose.
    h2 = jnp.dot(w2_ref[...], h1.astype(mxu_dtype),
                 preferred_element_type=jnp.float32)
    h2 = jnp.maximum(h2 + b2c_ref[...], 0.0)                        # (32, tm) f32

    # fc3 (out_features == 1): VPU multiply + cross-sublane (XLU) reduction.
    # Result is already lane-dense: (1, tm).
    y = jnp.sum(h2 * w3c_ref[...], axis=0, keepdims=True) + b3_ref[...]
    o_ref[...] = y.astype(o_ref.dtype)


def tabnet_forward(x, params, *, tm=16384, compute_dtype=jnp.float32,
                   x_is_transposed=False):
    """Forward pass matching TabNetModel.

    x: (B, 13) float32, or (13, B) with x_is_transposed=True (avoids the one
       remaining wrapper-side layout pass over x).
    params: PyTorch layout — w1 (64,13), b1 (64,), w2 (32,64), b2 (32,),
            w3 (1,32), b3 (1,).
    Returns (B, 1) float32."""
    if x_is_transposed:
        f_in, B = x.shape
        xt = x
    else:
        B, f_in = x.shape
        xt = x.T          # layout plumbing only; pass x_is_transposed=True to skip
    assert f_in == 13

    tm = _choose_tm(B, tm)
    grid = (pl.cdiv(B, tm),)

    # Low-precision storage only for the matmul weights; biases and the
    # bias/ReLU epilogues stay float32 (v5e has no bf16 VPU).
    w1 = params["w1"].astype(compute_dtype)                     # (64, 13)
    w2 = params["w2"].astype(compute_dtype)                     # (32, 64)
    b1c = params["b1"].reshape(64, 1).astype(jnp.float32)
    b2c = params["b2"].reshape(32, 1).astype(jnp.float32)
    w3c = params["w3"].reshape(32, 1).astype(jnp.float32)
    b3 = params["b3"].reshape(1, 1).astype(jnp.float32)

    full = lambda a: pl.BlockSpec(a.shape, lambda i: (0, 0))

    w_item = jnp.dtype(compute_dtype).itemsize
    cost = pl.CostEstimate(
        flops=2 * B * (13 * 64 + 64 * 32 + 32 * 1),
        transcendentals=0,
        bytes_accessed=(B * 13 * xt.dtype.itemsize + B * 4
                        + (64 * 13 + 32 * 64) * w_item
                        + (64 + 32 + 32 + 1) * 4),
    )

    out = pl.pallas_call(
        tabnet_kernel,
        out_shape=jax.ShapeDtypeStruct((1, B), jnp.float32),
        grid=grid,
        in_specs=[
            pl.BlockSpec((13, tm), lambda i: (0, i)),   # lane-dense x batch tile
            full(w1), full(b1c),
            full(w2), full(b2c),
            full(w3c), full(b3),
        ],
        out_specs=pl.BlockSpec((1, tm), lambda i: (0, i)),
        compiler_params=pltpu.CompilerParams(
            dimension_semantics=("parallel",),
            vmem_limit_bytes=32 * 1024 * 1024,
        ),
        cost_estimate=cost,
    )(xt, w1, b1c, w2, b2c, w3c, b3)

    # (1, B) -> (B, 1): metadata-only reshape.
    return out.reshape(B, 1)


def init_params(key):
    """Deterministic init mimicking nn.Linear's U(-1/sqrt(fan_in), 1/sqrt(fan_in));
    weights kept in PyTorch (out_features, in_features) layout."""
    def linear(k, fan_in, fan_out):
        kw, kb = jax.random.split(k)
        bound = 1.0 / float(fan_in) ** 0.5
        w = jax.random.uniform(kw, (fan_out, fan_in), jnp.float32, -bound, bound)
        b = jax.random.uniform(kb, (fan_out,), jnp.float32, -bound, bound)
        return w, b

    k1, k2, k3 = jax.random.split(key, 3)
    w1, b1 = linear(k1, 13, 64)
    w2, b2 = linear(k2, 64, 32)
    w3, b3 = linear(k3, 32, 1)
    return {"w1": w1, "b1": b1, "w2": w2, "b2": b2, "w3": w3, "b3": b3}


def reference_forward(x, p):
    h1 = jnp.maximum(x @ p["w1"].T + p["b1"], 0.0)
    h2 = jnp.maximum(h1 @ p["w2"].T + p["b2"], 0.0)
    return h2 @ p["w3"].T + p["b3"]


if __name__ == "__main__":
    key = jax.random.PRNGKey(0)
    key, kx = jax.random.split(key)
    B = 300                                   # deliberately not a 128 multiple
    x = jax.random.normal(kx, (B, 13), jnp.float32)
    params = init_params(key)

    ref = reference_forward(x, params)

    # float32 path: semantics-preserving; tolerance absorbs TPU default
    # matmul-precision differences between the kernel and the XLA reference.
    out_f32 = jax.block_until_ready(
        tabnet_forward(x, params, compute_dtype=jnp.float32))
    assert out_f32.shape == (B, 1)
    assert jnp.allclose(out_f32, ref, atol=2e-2, rtol=2e-2), \
        "f32 kernel mismatch vs pure-JAX reference"

    # Producer-already-transposed entry point (no wrapper layout pass).
    out_t = jax.block_until_ready(
        tabnet_forward(jnp.asarray(x.T), params, x_is_transposed=True))
    assert jnp.allclose(out_t, out_f32, atol=1e-5, rtol=1e-5), \
        "transposed-input path mismatch"

    # bf16 weights / MXU-feed path (bandwidth optimization): loose tolerance
    # for the bf16 quantization of the matmul inputs (x, h1) and W1/W2.
    out_bf16 = jax.block_until_ready(
        tabnet_forward(x, params, compute_dtype=jnp.bfloat16))
    assert out_bf16.shape == (B, 1)
    assert jnp.allclose(out_bf16, ref, atol=2e-1, rtol=2e-1), \
        "bf16 kernel mismatch vs pure-JAX reference"

    print("KERNEL_OK")
</pallas_src>

<mosaic_0001>
module attributes {stable_mosaic.version = 11 : i64} {
  func.func @tabnet_kernel(%arg0: i32, %arg1: memref<13x384xf32, #tpu.memory_space<vmem>>, %arg2: memref<64x13xf32, #tpu.memory_space<vmem>>, %arg3: memref<64x1xf32, #tpu.memory_space<vmem>>, %arg4: memref<32x64xf32, #tpu.memory_space<vmem>>, %arg5: memref<32x1xf32, #tpu.memory_space<vmem>>, %arg6: memref<32x1xf32, #tpu.memory_space<vmem>>, %arg7: memref<1x1xf32, #tpu.memory_space<vmem>>, %arg8: memref<1x384xf32, #tpu.memory_space<vmem>>) attributes {dimension_semantics = [#tpu.dimension_semantics<parallel>], iteration_bounds = array<i64: 1>, scalar_prefetch = 0 : i64, scratch_operands = 0 : i64, tpu.core_type = #tpu.core_type<tc>, window_params = [{transform_indices = @transform_0, window_bounds = array<i64: 13, 384>}, {pipeline_mode = #tpu.pipeline_mode<synchronous>, transform_indices = @transform_1, window_bounds = array<i64: 64, 13>}, {pipeline_mode = #tpu.pipeline_mode<synchronous>, transform_indices = @transform_2, window_bounds = array<i64: 64, 1>}, {pipeline_mode = #tpu.pipeline_mode<synchronous>, transform_indices = @transform_3, window_bounds = array<i64: 32, 64>}, {pipeline_mode = #tpu.pipeline_mode<synchronous>, transform_indices = @transform_4, window_bounds = array<i64: 32, 1>}, {pipeline_mode = #tpu.pipeline_mode<synchronous>, transform_indices = @transform_5, window_bounds = array<i64: 32, 1>}, {pipeline_mode = #tpu.pipeline_mode<synchronous>, transform_indices = @transform_6, window_bounds = array<i64: 1, 1>}, {transform_indices = @transform_7, window_bounds = array<i64: 1, 384>}]} {
    %c0 = arith.constant 0 : index
    %c0_0 = arith.constant 0 : index
    %0 = vector.load %arg1[%c0, %c0_0] : memref<13x384xf32, #tpu.memory_space<vmem>>, vector<13x384xf32>
    %c0_1 = arith.constant 0 : index
    %c0_2 = arith.constant 0 : index
    %1 = vector.load %arg2[%c0_1, %c0_2] : memref<64x13xf32, #tpu.memory_space<vmem>>, vector<64x13xf32>
    %cst = arith.constant dense<0.000000e+00> : vector<64x384xf32>
    %2 = tpu.matmul %1, %0, %cst {dimension_numbers = #tpu.dot_dimension_numbers<[1], [0], [0], [1], [0, 0, 1, 1], [], []>} : vector<64x13xf32>, vector<13x384xf32>, vector<64x384xf32> -> vector<64x384xf32>
    %c0_3 = arith.constant 0 : index
    %c0_4 = arith.constant 0 : index
    %3 = vector.load %arg3[%c0_3, %c0_4] : memref<64x1xf32, #tpu.memory_space<vmem>>, vector<64x1xf32>
    %4 = vector.broadcast %3 : vector<64x1xf32> to vector<64x384xf32>
    %5 = arith.addf %2, %4 : vector<64x384xf32>
    %cst_5 = arith.constant 0.000000e+00 : f32
    %6 = vector.broadcast %cst_5 : f32 to vector<64x384xf32>
    %7 = arith.maximumf %5, %6 : vector<64x384xf32>
    %c0_6 = arith.constant 0 : index
    %c0_7 = arith.constant 0 : index
    %8 = vector.load %arg4[%c0_6, %c0_7] : memref<32x64xf32, #tpu.memory_space<vmem>>, vector<32x64xf32>
    %cst_8 = arith.constant dense<0.000000e+00> : vector<32x384xf32>
    %9 = tpu.matmul %8, %7, %cst_8 {dimension_numbers = #tpu.dot_dimension_numbers<[1], [0], [0], [1], [0, 0, 1, 1], [], []>} : vector<32x64xf32>, vector<64x384xf32>, vector<32x384xf32> -> vector<32x384xf32>
    %c0_9 = arith.constant 0 : index
    %c0_10 = arith.constant 0 : index
    %10 = vector.load %arg5[%c0_9, %c0_10] : memref<32x1xf32, #tpu.memory_space<vmem>>, vector<32x1xf32>
    %11 = vector.broadcast %10 : vector<32x1xf32> to vector<32x384xf32>
    %12 = arith.addf %9, %11 : vector<32x384xf32>
    %cst_11 = arith.constant 0.000000e+00 : f32
    %13 = vector.broadcast %cst_11 : f32 to vector<32x384xf32>
    %14 = arith.maximumf %12, %13 : vector<32x384xf32>
    %c0_12 = arith.constant 0 : index
    %c0_13 = arith.constant 0 : index
    %15 = vector.load %arg6[%c0_12, %c0_13] : memref<32x1xf32, #tpu.memory_space<vmem>>, vector<32x1xf32>
    %16 = vector.broadcast %15 : vector<32x1xf32> to vector<32x384xf32>
    %17 = arith.mulf %14, %16 : vector<32x384xf32>
    %cst_14 = arith.constant dense<0.000000e+00> : vector<384xf32>
    %18 = vector.multi_reduction <add>, %17, %cst_14 [0] : vector<32x384xf32> to vector<384xf32>
    %19 = vector.shape_cast %18 : vector<384xf32> to vector<1x384xf32>
    %c0_15 = arith.constant 0 : index
    %c0_16 = arith.constant 0 : index
    %20 = vector.load %arg7[%c0_15, %c0_16] : memref<1x1xf32, #tpu.memory_space<vmem>>, vector<1x1xf32>
    %21 = vector.broadcast %20 : vector<1x1xf32> to vector<1x384xf32>
    %22 = arith.addf %19, %21 : vector<1x384xf32>
    %c0_17 = arith.constant 0 : index
    %c0_18 = arith.constant 0 : index
    %23 = vector.load %arg8[%c0_17, %c0_18] : memref<1x384xf32, #tpu.memory_space<vmem>>, vector<1x384xf32>
    tpu.vector_store %arg8[%c0_17, %c0_18], %22 {strides = array<i32>} : memref<1x384xf32, #tpu.memory_space<vmem>>, vector<1x384xf32>,
    return
  }
  func.func @transform_0(%arg0: i32) -> (i32, i32) {
    %c0_i32 = arith.constant 0 : i32
    %c0_i32_0 = arith.constant 0 : i32
    return %c0_i32, %arg0 : i32, i32
  }
  func.func @transform_1(%arg0: i32) -> (i32, i32) {
    %c0_i32 = arith.constant 0 : i32
    %c0_i32_0 = arith.constant 0 : i32
    %c0_i32_1 = arith.constant 0 : i32
    return %c0_i32, %c0_i32_0 : i32, i32
  }
  func.func @transform_2(%arg0: i32) -> (i32, i32) {
    %c0_i32 = arith.constant 0 : i32
    %c0_i32_0 = arith.constant 0 : i32
    %c0_i32_1 = arith.constant 0 : i32
    return %c0_i32, %c0_i32_0 : i32, i32
  }
  func.func @transform_3(%arg0: i32) -> (i32, i32) {
    %c0_i32 = arith.constant 0 : i32
    %c0_i32_0 = arith.constant 0 : i32
    %c0_i32_1 = arith.constant 0 : i32
    return %c0_i32, %c0_i32_0 : i32, i32
  }
  func.func @transform_4(%arg0: i32) -> (i32, i32) {
    %c0_i32 = arith.constant 0 : i32
    %c0_i32_0 = arith.constant 0 : i32
    %c0_i32_1 = arith.constant 0 : i32
    return %c0_i32, %c0_i32_0 : i32, i32
  }
  func.func @transform_5(%arg0: i32) -> (i32, i32) {
    %c0_i32 = arith.constant 0 : i32
    %c0_i32_0 = arith.constant 0 : i32
    %c0_i32_1 = arith.constant 0 : i32
    return %c0_i32, %c0_i32_0 : i32, i32
  }
  func.func @transform_6(%arg0: i32) -> (i32, i32) {
    %c0_i32 = arith.constant 0 : i32
    %c0_i32_0 = arith.constant 0 : i32
    %c0_i32_1 = arith.constant 0 : i32
    return %c0_i32, %c0_i32_0 : i32, i32
  }
  func.func @transform_7(%arg0: i32) -> (i32, i32) {
    %c0_i32 = arith.constant 0 : i32
    %c0_i32_0 = arith.constant 0 : i32
    return %c0_i32, %arg0 : i32, i32
  }
}

</mosaic_0001>

<llo_original>
// kernel: tpu_custom_call.1
$region0: #{tpu_custom_call.1}
  #allocation0 [shape = 'u32[]', space=smem, size = 0x4, offset = 0x4, fixed_abs, tag = 'smem constant byte address 0x4 - core index']
  #allocation1 [shape = 'u32[72,128]{1,0:T(1,128)}', space=vmem, size = 0x9000, scoped, tag = 'internal scratch']
  #allocation2 [shape = 'f32[1,1]{1,0:T(1,128)S(1)}', space=vmem, size = 0x200, scoped, tag = 'scoped memory for tpu_custom_call.1']
  %s0 = inlined_call_operand.vmem [shape: f32[13,300], index: 0, kind: input, shape index: {}]
  %s1 = inlined_call_operand.vmem [shape: f32[64,13], index: 1, kind: input, shape index: {}]
  %s2 = inlined_call_operand.vmem [shape: f32[64,1], index: 2, kind: input, shape index: {}]
  %s3 = inlined_call_operand.vmem [shape: f32[32,64], index: 3, kind: input, shape index: {}]
  %s4 = inlined_call_operand.vmem [shape: f32[32,1], index: 4, kind: input, shape index: {}]
  %s5 = inlined_call_operand.vmem [shape: f32[32,1], index: 5, kind: input, shape index: {}]
  %s6 = inlined_call_operand.<no memory space> [shape: f32[1,1], index: 6, kind: input, shape index: {}]
  %s7 = inlined_call_operand.hbm [shape: f32[1,300], index: 7, kind: output, shape index: {}]
  %s8 = sld [smem:[#allocation0]]
  $region38: #{tpu_custom_call.1} parent=0
    _
  %s10 = ssub.s32 1, %s8
  %s11 = scalar_select 0, %s10, %s8
  %v12 = vstv %s6
  %13 = vst [vmem:[#allocation2] sm:$0x1] %v12
  $region1: #{tpu_custom_call.1} parent=0
    #allocation3 [shape = 'u8[1536]{0}', space=vmem, size = 0x800, scoped, tag = 'output window, operand 0, single buffered']
    #allocation4 [shape = 's32[1]{0}', space=sflag, size = 0x4, scoped, tag = 'scoped memory for tpu_custom_call.1']
    %14 = vsyncpa [#allocation4], 0
    // Predicated region
    $region2: #{tpu_custom_call.1} parent=1 // pred_check
      _
    $region3: #{tpu_custom_call.1} parent=1 // pred_check_branch
      %16 = sbr.rel (0) target = $region5
    $region4: #{tpu_custom_call.1} parent=1 // pred_region
      _
    $region5: #{tpu_custom_call.1} parent=1 // pred_fallthru
      _
    // Predicated region
    $region6: #{tpu_custom_call.1} parent=1 // pred_check
      _
    $region7: #{tpu_custom_call.1} parent=1 // pred_check_branch
      %18 = sbr.rel (0) target = $region9
    $region8: #{tpu_custom_call.1} parent=1 // pred_region
      _
    $region9: #{tpu_custom_call.1} parent=1 // pred_fallthru
      _
    // Predicated region
    $region10: #{tpu_custom_call.1} parent=1 // pred_check
      _
    $region11: #{tpu_custom_call.1} parent=1 // pred_check_branch
      %20 = sbr.rel (0) target = $region13
    $region12: #{tpu_custom_call.1} parent=1 // pred_region
      _
    $region13: #{tpu_custom_call.1} parent=1 // pred_fallthru
      _
    // Predicated region
    $region14: #{tpu_custom_call.1} parent=1 // pred_check
      _
    $region15: #{tpu_custom_call.1} parent=1 // pred_check_branch
      %22 = sbr.rel (0) target = $region17
    $region16: #{tpu_custom_call.1} parent=1 // pred_region
      _
    $region17: #{tpu_custom_call.1} parent=1 // pred_fallthru
      _
    // Predicated region
    $region18: #{tpu_custom_call.1} parent=1 // pred_check
      _
    $region19: #{tpu_custom_call.1} parent=1 // pred_check_branch
      %24 = sbr.rel (0) target = $region21
    $region20: #{tpu_custom_call.1} parent=1 // pred_region
      _
    $region21: #{tpu_custom_call.1} parent=1 // pred_fallthru
      _
    // Predicated region
    $region22: #{tpu_custom_call.1} parent=1 // pred_check
      _
    $region23: #{tpu_custom_call.1} parent=1 // pred_check_branch
      %26 = sbr.rel (0) target = $region25
    $region24: #{tpu_custom_call.1} parent=1 // pred_region
      _
    $region25: #{tpu_custom_call.1} parent=1 // pred_fallthru
      _
    // Predicated region
    $region26: #{tpu_custom_call.1} parent=1 // pred_check
      _
    $region27: #{tpu_custom_call.1} parent=1 // pred_check_branch
      %28 = sbr.rel (0) target = $region29
    $region28: #{tpu_custom_call.1} parent=1 // pred_region
      _
    $region29: #{tpu_custom_call.1} parent=1 // pred_fallthru
      _
    %v29 = vld [vmem:[%s0] sm:$0xff]
    %v30 = vld [vmem:[%s0 + $0x8] sm:$0xff]
    %v31 = vld [vmem:[%s0 + $0x10] sm:$0xff]
    %v32 = vld [vmem:[%s0 + $0x18] sm:$0x1f]
    %v33 = vld [vmem:[%s0 + $0x20] sm:$0x1f]
    %v34 = vld [vmem:[%s0 + $0x28] sm:$0x1f]
    %v35 = vld [vmem:[%s1] sm:$0xff]
    %v36 = vld [vmem:[%s1 + $0x8] sm:$0xff]
    %v37 = vld [vmem:[%s1 + $0x10] sm:$0xff]
    %v38 = vld [vmem:[%s1 + $0x18] sm:$0xff]
    %v39 = vld [vmem:[%s1 + $0x20] sm:$0xff]
    %v40 = vld [vmem:[%s1 + $0x28] sm:$0xff]
    %v41 = vld [vmem:[%s1 + $0x30] sm:$0xff]
    %v42 = vld [vmem:[%s1 + $0x38] sm:$0xff]
    %v43 = vld [vmem:[%s2] sm:$0xff]
    %v44 = vld [vmem:[%s2 + $0x8] sm:$0xff]
    %v45 = vld [vmem:[%s2 + $0x10] sm:$0xff]
    %v46 = vld [vmem:[%s2 + $0x18] sm:$0xff]
    %v47 = vld [vmem:[%s2 + $0x20] sm:$0xff]
    %v48 = vld [vmem:[%s2 + $0x28] sm:$0xff]
    %v49 = vld [vmem:[%s2 + $0x30] sm:$0xff]
    %v50 = vld [vmem:[%s2 + $0x38] sm:$0xff]
    %52 = vset.pattern.permute.xlu0 0
    %53 = vperm.xlu0 %52, %v43
    %v54 = vpop.permute.xlu0 %53
    %57 = vset.pattern.permute.xlu0 0
    %58 = vperm.xlu0 %57, %v44
    %v59 = vpop.permute.xlu0 %58
    %62 = vset.pattern.permute.xlu0 0
    %63 = vperm.xlu0 %62, %v45
    %v64 = vpop.permute.xlu0 %63
    %67 = vset.pattern.permute.xlu0 0
    %68 = vperm.xlu0 %67, %v46
    %v69 = vpop.permute.xlu0 %68
    %72 = vset.pattern.permute.xlu0 0
    %73 = vperm.xlu0 %72, %v47
    %v74 = vpop.permute.xlu0 %73
    %77 = vset.pattern.permute.xlu0 0
    %78 = vperm.xlu0 %77, %v48
    %v79 = vpop.permute.xlu0 %78
    %82 = vset.pattern.permute.xlu0 0
    %83 = vperm.xlu0 %82, %v49
    %v84 = vpop.permute.xlu0 %83
    %87 = vset.pattern.permute.xlu0 0
    %88 = vperm.xlu0 %87, %v50
    %v89 = vpop.permute.xlu0 %88
    %vm91 = vcmask 105472
    %v93 = vsel %vm91, %v35, 0
    %v96 = vsel %vm91, %v36, 0
    %v99 = vsel %vm91, %v37, 0
    %v102 = vsel %vm91, %v38, 0
    %v105 = vsel %vm91, %v39, 0
    %v108 = vsel %vm91, %v40, 0
    %v111 = vsel %vm91, %v41, 0
    %v114 = vsel %vm91, %v42, 0
    %vm116 = vcmask 1044480
    %v118 = vsel %vm116, %v32, 0
    %v121 = vsel %vm116, %v33, 0
    %v124 = vsel %vm116, %v34, 0
    %126 = vmatpush.msra.mxu0 0.0
    %127 = vmatpush.msra.mxu0 0.0
    %128 = vmatpush.msra.mxu0 0.0
    %129 = vmatpush.msra.mxu0 0.0
    %130 = vmatpush.msra.mxu0 0.0
    %131 = vmatpush.msra.mxu0 0.0
    %132 = vmatpush.msra.mxu0 0.0
    %133 = vmatpush.msra.mxu0 0.0
    %134 = vmatpush.msra.mxu0 0.0
    %135 = vmatpush.msra.mxu0 0.0
    %136 = vmatpush.msra.mxu0 0.0
    %137 = vmatpush.msra.mxu0 0.0
    %138 = vmatpush.msra.mxu0 0.0
    %139 = vmatpush.msra.mxu0 0.0
    %140 = vmatpush.msra.mxu0 %v118
    %141 = vmatpush.msra.mxu0 %v29
    %142 = vmatmul.f32.gmra.mxu0 %v93
    %v143 = vpop.f32.mrf.mxu0
    %v144 = vadd.f32 %v54, %v143
    %145 = vmatmul.f32.gmra.mxu0 %v96
    %v146 = vpop.f32.mrf.mxu0
    %v147 = vadd.f32 %v59, %v146
    %148 = vmatmul.f32.gmra.mxu0 %v99
    %v149 = vpop.f32.mrf.mxu0
    %v150 = vadd.f32 %v64, %v149
    %151 = vmatmul.f32.gmra.mxu0 %v102
    %v152 = vpop.f32.mrf.mxu0
    %v153 = vadd.f32 %v69, %v152
    %154 = vmatmul.f32.gmra.mxu0 %v105
    %v155 = vpop.f32.mrf.mxu0
    %v156 = vadd.f32 %v74, %v155
    %157 = vmatmul.f32.gmra.mxu0 %v108
    %v158 = vpop.f32.mrf.mxu0
    %v159 = vadd.f32 %v79, %v158
    %160 = vmatmul.f32.gmra.mxu0 %v111
    %v161 = vpop.f32.mrf.mxu0
    %v162 = vadd.f32 %v84, %v161
    %163 = vmatmul.f32.gmra.mxu0 %v114
    %v164 = vpop.f32.mrf.mxu0
    %v165 = vadd.f32 %v89, %v164
    %166 = vdwg.mxu0
    %167 = vmatpush.msra.mxu0 0.0
    %168 = vmatpush.msra.mxu0 0.0
    %169 = vmatpush.msra.mxu0 0.0
    %170 = vmatpush.msra.mxu0 0.0
    %171 = vmatpush.msra.mxu0 0.0
    %172 = vmatpush.msra.mxu0 0.0
    %173 = vmatpush.msra.mxu0 0.0
    %174 = vmatpush.msra.mxu0 0.0
    %175 = vmatpush.msra.mxu0 0.0
    %176 = vmatpush.msra.mxu0 0.0
    %177 = vmatpush.msra.mxu0 0.0
    %178 = vmatpush.msra.mxu0 0.0
    %179 = vmatpush.msra.mxu0 0.0
    %180 = vmatpush.msra.mxu0 0.0
    %181 = vmatpush.msra.mxu0 %v121
    %182 = vmatpush.msra.mxu0 %v30
    %183 = vmatmul.f32.gmra.mxu0 %v93
    %v184 = vpop.f32.mrf.mxu0
    %v185 = vadd.f32 %v54, %v184
    %186 = vmatmul.f32.gmra.mxu0 %v96
    %v187 = vpop.f32.mrf.mxu0
    %v188 = vadd.f32 %v59, %v187
    %189 = vmatmul.f32.gmra.mxu0 %v99
    %v190 = vpop.f32.mrf.mxu0
    %v191 = vadd.f32 %v64, %v190
    %192 = vmatmul.f32.gmra.mxu0 %v102
    %v193 = vpop.f32.mrf.mxu0
    %v194 = vadd.f32 %v69, %v193
    %195 = vmatmul.f32.gmra.mxu0 %v105
    %v196 = vpop.f32.mrf.mxu0
    %v197 = vadd.f32 %v74, %v196
    %198 = vmatmul.f32.gmra.mxu0 %v108
    %v199 = vpop.f32.mrf.mxu0
    %v200 = vadd.f32 %v79, %v199
    %201 = vmatmul.f32.gmra.mxu0 %v111
    %v202 = vpop.f32.mrf.mxu0
    %v203 = vadd.f32 %v84, %v202
    %204 = vmatmul.f32.gmra.mxu0 %v114
    %v205 = vpop.f32.mrf.mxu0
    %v206 = vadd.f32 %v89, %v205
    %207 = vdwg.mxu0
    %208 = vmatpush.msra.mxu0 0.0
    %209 = vmatpush.msra.mxu0 0.0
    %210 = vmatpush.msra.mxu0 0.0
    %211 = vmatpush.msra.mxu0 0.0
    %212 = vmatpush.msra.mxu0 0.0
    %213 = vmatpush.msra.mxu0 0.0
    %214 = vmatpush.msra.mxu0 0.0
    %215 = vmatpush.msra.mxu0 0.0
    %216 = vmatpush.msra.mxu0 0.0
    %217 = vmatpush.msra.mxu0 0.0
    %218 = vmatpush.msra.mxu0 0.0
    %219 = vmatpush.msra.mxu0 0.0
    %220 = vmatpush.msra.mxu0 0.0
    %221 = vmatpush.msra.mxu0 0.0
    %222 = vmatpush.msra.mxu0 %v124
    %223 = vmatpush.msra.mxu0 %v31
    %224 = vmatmul.f32.gmra.mxu0 %v93
    %v225 = vpop.f32.mrf.mxu0
    %v226 = vadd.f32 %v54, %v225
    %227 = vmatmul.f32.gmra.mxu0 %v96
    %v228 = vpop.f32.mrf.mxu0
    %v229 = vadd.f32 %v59, %v228
    %230 = vmatmul.f32.gmra.mxu0 %v99
    %v231 = vpop.f32.mrf.mxu0
    %v232 = vadd.f32 %v64, %v231
    %233 = vmatmul.f32.gmra.mxu0 %v102
    %v234 = vpop.f32.mrf.mxu0
    %v235 = vadd.f32 %v69, %v234
    %236 = vmatmul.f32.gmra.mxu0 %v105
    %v237 = vpop.f32.mrf.mxu0
    %v238 = vadd.f32 %v74, %v237
    %239 = vmatmul.f32.gmra.mxu0 %v108
    %v240 = vpop.f32.mrf.mxu0
    %v241 = vadd.f32 %v79, %v240
    %242 = vmatmul.f32.gmra.mxu0 %v111
    %v243 = vpop.f32.mrf.mxu0
    %v244 = vadd.f32 %v84, %v243
    %245 = vmatmul.f32.gmra.mxu0 %v114
    %v246 = vpop.f32.mrf.mxu0
    %v247 = vadd.f32 %v89, %v246
    %248 = vdwg.mxu0
    %v249 = vmax.f32 %v144, 0.0
    %v250 = vmax.f32 %v185, 0.0
    %v251 = vmax.f32 %v226, 0.0
    %v252 = vmax.f32 %v147, 0.0
    %v253 = vmax.f32 %v188, 0.0
    %v254 = vmax.f32 %v229, 0.0
    %v255 = vmax.f32 %v150, 0.0
    %v256 = vmax.f32 %v191, 0.0
    %v257 = vmax.f32 %v232, 0.0
    %v258 = vmax.f32 %v153, 0.0
    %v259 = vmax.f32 %v194, 0.0
    %v260 = vmax.f32 %v235, 0.0
    %v261 = vmax.f32 %v156, 0.0
    %v262 = vmax.f32 %v197, 0.0
    %v263 = vmax.f32 %v238, 0.0
    %v264 = vmax.f32 %v159, 0.0
    %v265 = vmax.f32 %v200, 0.0
    %v266 = vmax.f32 %v241, 0.0
    %v267 = vmax.f32 %v162, 0.0
    %v268 = vmax.f32 %v203, 0.0
    %v269 = vmax.f32 %v244, 0.0
    %v270 = vmax.f32 %v165, 0.0
    %v271 = vmax.f32 %v206, 0.0
    %v272 = vmax.f32 %v247, 0.0
    %v273 = vld [vmem:[%s3] sm:$0xff]
    %v274 = vld [vmem:[%s3 + $0x8] sm:$0xff]
    %v275 = vld [vmem:[%s3 + $0x10] sm:$0xff]
    %v276 = vld [vmem:[%s3 + $0x18] sm:$0xff]
    %v277 = vld [vmem:[%s4] sm:$0xff]
    %v278 = vld [vmem:[%s4 + $0x8] sm:$0xff]
    %v279 = vld [vmem:[%s4 + $0x10] sm:$0xff]
    %v280 = vld [vmem:[%s4 + $0x18] sm:$0xff]
    %282 = vset.pattern.permute.xlu0 0
    %283 = vperm.xlu0 %282, %v277
    %v284 = vpop.permute.xlu0 %283
    %287 = vset.pattern.permute.xlu0 0
    %288 = vperm.xlu0 %287, %v278
    %v289 = vpop.permute.xlu0 %288
    %292 = vset.pattern.permute.xlu0 0
    %293 = vperm.xlu0 %292, %v279
    %v294 = vpop.permute.xlu0 %293
    %297 = vset.pattern.permute.xlu0 0
    %298 = vperm.xlu0 %297, %v280
    %v299 = vpop.permute.xlu0 %298
    %vm301 = vcmask 523264
    %v303 = vsel %vm301, %v273, 0
    %v306 = vsel %vm301, %v274, 0
    %v309 = vsel %vm301, %v275, 0
    %v312 = vsel %vm301, %v276, 0
    %314 = vmatpush.msra.mxu0 0.0
    %315 = vmatpush.msra.mxu0 0.0
    %316 = vmatpush.msra.mxu0 0.0
    %317 = vmatpush.msra.mxu0 0.0
    %318 = vmatpush.msra.mxu0 0.0
    %319 = vmatpush.msra.mxu0 0.0
    %320 = vmatpush.msra.mxu0 0.0
    %321 = vmatpush.msra.mxu0 0.0
    %322 = vmatpush.msra.mxu0 %v270
    %323 = vmatpush.msra.mxu0 %v267
    %324 = vmatpush.msra.mxu0 %v264
    %325 = vmatpush.msra.mxu0 %v261
    %326 = vmatpush.msra.mxu0 %v258
    %327 = vmatpush.msra.mxu0 %v255
    %328 = vmatpush.msra.mxu0 %v252
    %329 = vmatpush.msra.mxu0 %v249
    %330 = vmatmul.f32.gmra.mxu0 %v303
    %v331 = vpop.f32.mrf.mxu0
    %v332 = vadd.f32 %v284, %v331
    %333 = vmatmul.f32.gmra.mxu0 %v306
    %v334 = vpop.f32.mrf.mxu0
    %v335 = vadd.f32 %v289, %v334
    %336 = vmatmul.f32.gmra.mxu0 %v309
    %v337 = vpop.f32.mrf.mxu0
    %v338 = vadd.f32 %v294, %v337
    %339 = vmatmul.f32.gmra.mxu0 %v312
    %v340 = vpop.f32.mrf.mxu0
    %v341 = vadd.f32 %v299, %v340
    %342 = vdwg.mxu0
    %343 = vmatpush.msra.mxu0 0.0
    %344 = vmatpush.msra.mxu0 0.0
    %345 = vmatpush.msra.mxu0 0.0
    %346 = vmatpush.msra.mxu0 0.0
    %347 = vmatpush.msra.mxu0 0.0
    %348 = vmatpush.msra.mxu0 0.0
    %349 = vmatpush.msra.mxu0 0.0
    %350 = vmatpush.msra.mxu0 0.0
    %351 = vmatpush.msra.mxu0 %v271
    %352 = vmatpush.msra.mxu0 %v268
    %353 = vmatpush.msra.mxu0 %v265
    %354 = vmatpush.msra.mxu0 %v262
    %355 = vmatpush.msra.mxu0 %v259
    %356 = vmatpush.msra.mxu0 %v256
    %357 = vmatpush.msra.mxu0 %v253
    %358 = vmatpush.msra.mxu0 %v250
    %359 = vmatmul.f32.gmra.mxu0 %v303
    %v360 = vpop.f32.mrf.mxu0
    %v361 = vadd.f32 %v284, %v360
    %362 = vmatmul.f32.gmra.mxu0 %v306
    %v363 = vpop.f32.mrf.mxu0
    %v364 = vadd.f32 %v289, %v363
    %365 = vmatmul.f32.gmra.mxu0 %v309
    %v366 = vpop.f32.mrf.mxu0
    %v367 = vadd.f32 %v294, %v366
    %368 = vmatmul.f32.gmra.mxu0 %v312
    %v369 = vpop.f32.mrf.mxu0
    %v370 = vadd.f32 %v299, %v369
    %371 = vdwg.mxu0
    %372 = vmatpush.msra.mxu0 0.0
    %373 = vmatpush.msra.mxu0 0.0
    %374 = vmatpush.msra.mxu0 0.0
    %375 = vmatpush.msra.mxu0 0.0
    %376 = vmatpush.msra.mxu0 0.0
    %377 = vmatpush.msra.mxu0 0.0
    %378 = vmatpush.msra.mxu0 0.0
    %379 = vmatpush.msra.mxu0 0.0
    %380 = vmatpush.msra.mxu0 %v272
    %381 = vmatpush.msra.mxu0 %v269
    %382 = vmatpush.msra.mxu0 %v266
    %383 = vmatpush.msra.mxu0 %v263
    %384 = vmatpush.msra.mxu0 %v260
    %385 = vmatpush.msra.mxu0 %v257
    %386 = vmatpush.msra.mxu0 %v254
    %387 = vmatpush.msra.mxu0 %v251
    %388 = vmatmul.f32.gmra.mxu0 %v303
    %v389 = vpop.f32.mrf.mxu0
    %v390 = vadd.f32 %v284, %v389
    %391 = vmatmul.f32.gmra.mxu0 %v306
    %v392 = vpop.f32.mrf.mxu0
    %v393 = vadd.f32 %v289, %v392
    %394 = vmatmul.f32.gmra.mxu0 %v309
    %v395 = vpop.f32.mrf.mxu0
    %v396 = vadd.f32 %v294, %v395
    %397 = vmatmul.f32.gmra.mxu0 %v312
    %v398 = vpop.f32.mrf.mxu0
    %v399 = vadd.f32 %v299, %v398
    %400 = vdwg.mxu0
    %v401 = vmax.f32 %v332, 0.0
    %v402 = vmax.f32 %v361, 0.0
    %v403 = vmax.f32 %v390, 0.0
    %v404 = vmax.f32 %v335, 0.0
    %v405 = vmax.f32 %v364, 0.0
    %v406 = vmax.f32 %v393, 0.0
    %v407 = vmax.f32 %v338, 0.0
    %v408 = vmax.f32 %v367, 0.0
    %v409 = vmax.f32 %v396, 0.0
    %v410 = vmax.f32 %v341, 0.0
    %v411 = vmax.f32 %v370, 0.0
    %v412 = vmax.f32 %v399, 0.0
    %v413 = vld [vmem:[%s5] sm:$0xff]
    %v414 = vld [vmem:[%s5 + $0x8] sm:$0xff]
    %v415 = vld [vmem:[%s5 + $0x10] sm:$0xff]
    %v416 = vld [vmem:[%s5 + $0x18] sm:$0xff]
    %418 = vset.pattern.permute.xlu0 0
    %419 = vperm.xlu0 %418, %v413
    %v420 = vpop.permute.xlu0 %419
    %423 = vset.pattern.permute.xlu0 0
    %424 = vperm.xlu0 %423, %v414
    %v425 = vpop.permute.xlu0 %424
    %428 = vset.pattern.permute.xlu0 0
    %429 = vperm.xlu0 %428, %v415
    %v430 = vpop.permute.xlu0 %429
    %433 = vset.pattern.permute.xlu0 0
    %434 = vperm.xlu0 %433, %v416
    %v435 = vpop.permute.xlu0 %434
    %v437 = vmul.f32 %v401, %v420
    %v438 = vmul.f32 %v402, %v420
    %v439 = vmul.f32 %v403, %v420
    %v440 = vmul.f32 %v404, %v425
    %v441 = vmul.f32 %v405, %v425
    %v442 = vmul.f32 %v406, %v425
    %v443 = vmul.f32 %v407, %v430
    %v444 = vmul.f32 %v408, %v430
    %v445 = vmul.f32 %v409, %v430
    %v446 = vmul.f32 %v410, %v435
    %v447 = vmul.f32 %v411, %v435
    %v448 = vmul.f32 %v412, %v435
    %v449 = vadd.f32 %v437, %v440
    %v450 = vadd.f32 %v449, %v443
    %v451 = vadd.f32 %v450, %v446
    %v452 = vrot.slane %v451, 4
    %v453 = vadd.f32 %v451, %v452
    %v454 = vrot.slane %v453, 2
    %v455 = vadd.f32 %v453, %v454
    %v456 = vrot.slane %v455, 1
    %v457 = vadd.f32 %v455, %v456
    %v458 = vadd.f32 %v438, %v441
    %v459 = vadd.f32 %v458, %v444
    %v460 = vadd.f32 %v459, %v447
    %v461 = vrot.slane %v460, 4
    %v462 = vadd.f32 %v460, %v461
    %v463 = vrot.slane %v462, 2
    %v464 = vadd.f32 %v462, %v463
    %v465 = vrot.slane %v464, 1
    %v466 = vadd.f32 %v464, %v465
    %v467 = vadd.f32 %v439, %v442
    %v468 = vadd.f32 %v467, %v445
    %v469 = vadd.f32 %v468, %v448
    %v470 = vrot.slane %v469, 4
    %v471 = vadd.f32 %v469, %v470
    %v472 = vrot.slane %v471, 2
    %v473 = vadd.f32 %v471, %v472
    %v474 = vrot.slane %v473, 1
    %v475 = vadd.f32 %v473, %v474
    %v476 = vld [vmem:[#allocation2] sm:$0x1]
    %478 = vset.pattern.permute.xlu0 0
    %479 = vperm.xlu0 %478, %v476
    %v480 = vpop.permute.xlu0 %479
    %v482 = vperm.slane %v480, 0
    %v483 = vadd.f32 %v457, %v482
    %v484 = vadd.f32 %v466, %v482
    %v485 = vadd.f32 %v475, %v482
    %v489 = vrot.slane %v484, 7
    %v490 = vrot.slane %v485, 6
    %vm491 = vcmask 1040384
    %v492 = vsel %vm491, %v483, %v489
    %vm493 = vcmask 1041408
    %v494 = vsel %vm493, %v492, %v490
    %v496 = vlaneseq
    %vm497 = vcmp.ge.s32.totalorder %v496, 0
    %vm498 = vcmp.lt.s32.totalorder %v496, 384
    %vm499 = vmand %vm497, %vm498
    %500 = vst.msk [vmem:[#allocation3] sm:$0x7] %vm499, %v494
    // Predicated region
    $region30: #{tpu_custom_call.1} parent=1 // pred_check
      _
    $region31: #{tpu_custom_call.1} parent=1 // pred_check_branch
      %502 = sbr.rel (0) target = $region33
    $region32: #{tpu_custom_call.1} parent=1 // pred_region
      %504 = vsyncadd [#allocation4], 0
      %s506 = sshll.u32 [#allocation3], 4
      %s507 = int_to_ptr.vmem [resolvable:$true] %s506
      %s508 = sshll.u32 %s7, 4
      %s509 = int_to_ptr.hbm [resolvable:$true] %s508
      %511 = dma.vmem_to_hbm [thread:$0]  %s507, 48, %s509, [#allocation4]
    $region33: #{tpu_custom_call.1} parent=1 // pred_fallthru
      _
    // Predicated region
    $region34: #{tpu_custom_call.1} parent=1 // pred_check
      _
    $region35: #{tpu_custom_call.1} parent=1 // pred_check_branch
      %513 = sbr.rel (0) target = $region37
    $region36: #{tpu_custom_call.1} parent=1 // pred_region
      %515 = dma.done [#allocation4], 48
    $region37: #{tpu_custom_call.1} parent=1 // pred_fallthru
      _
    %516 = vsyncpa [#allocation4], 1

</llo_original>
